<compile_context>
chip_gen: v6e
topology: v6e:2x2x1
jax: 0.10.0
libtpu: 0.0.40
codegen_flags: <defaults>
</compile_context>

<pallas_src>
import functools
import math

import jax
import jax.numpy as jnp
from jax.experimental import pallas as pl
from jax.experimental.pallas import tpu as pltpu

_LANE = 128
_SUBLANE = 8
_LOG4 = math.log(4.0)
_LOG16 = math.log(16.0)
# Conservative total budget for pipelined input buffers (2 bufs per input).
# ~2 MiB per buffer is at the measured pipelining knee; safe on v5e/v6e/v7x.
_INPUT_VMEM_BUDGET = 8 * 1024 * 1024
_VMEM_LIMIT_BYTES = 32 * 1024 * 1024


def _round_up(x, m):
    return -(-x // m) * m


# ---------------------------------------------------------------------------
# Kernels
# ---------------------------------------------------------------------------

def _kl_normal_kernel(mean_ref, logvar_ref, out_ref, acc_ref, *, n_valid_rows, scale):
    # mean_ref / logvar_ref: [TB, W] VMEM tiles; acc_ref: [acc_rows, W] f32 vreg
    # accumulator; out_ref: [1, 1] f32 written only on the final grid step.
    tb, w = mean_ref.shape

    @pl.when(pl.program_id(0) == 0)
    def _():
        acc_ref[...] = jnp.zeros_like(acc_ref)

    # Mask the INPUTS of the (possibly ragged) last tile: out-of-bounds block
    # contents are undefined, so zero them before exp() to keep everything finite.
    row0 = pl.program_id(0) * tb
    row_ids = row0 + jax.lax.broadcasted_iota(jnp.int32, (tb, w), 0)
    valid = row_ids < n_valid_rows
    m = jnp.where(valid, mean_ref[...].astype(jnp.float32), 0.0)
    lv = jnp.where(valid, logvar_ref[...].astype(jnp.float32), 0.0)

    # Per-element contribution; masked rows (m=0, lv=0) give 0 + 1 - 0 - 1 == 0.
    val = m * m + jnp.exp(lv) - lv - 1.0

    acc_rows = acc_ref.shape[0]
    if tb > acc_rows:
        # Fold sublane groups with plain VPU adds; no cross-lane reduce per step.
        part = jnp.sum(val.reshape(tb // acc_rows, acc_rows, w), axis=0)
    else:
        part = val
    acc_ref[...] = acc_ref[...] + part

    @pl.when(pl.program_id(0) == pl.num_programs(0) - 1)
    def _():
        # Single cross-lane/sublane collapse + 0.5/B scale at the very end.
        out_ref[...] = jnp.sum(acc_ref[...], keepdims=True) * scale


def _kl_cayley_kernel(p_ref, out_ref, acc_ref, *, dim, inv_n):
    # p_ref: [TR, 128] VMEM tile of gammas (padded with 1.0 -> contributes 0).
    tr, w = p_ref.shape

    @pl.when(pl.program_id(0) == 0)
    def _():
        acc_ref[...] = jnp.zeros_like(acc_ref)

    g = p_ref[...].astype(jnp.float32)
    # Rewritten in terms of gamma (kappa = (1-g)/(1+g)) to avoid f32 cancellation:
    #   1 - kappa   = 2g/(1+g)
    #   1 - kappa^2 = 4g/(1+g)^2
    if dim == 2:
        # -log(1 - k^2)
        val = 2.0 * jnp.log1p(g) - jnp.log(g) - _LOG4
    else:  # dim == 3
        # -log(1 - k^2) - 2*log(1 - k) - 2*k
        val = (4.0 * jnp.log1p(g) - 3.0 * jnp.log(g) - _LOG16
               - 2.0 * (1.0 - g) / (1.0 + g))

    acc_rows = acc_ref.shape[0]
    if tr > acc_rows:
        part = jnp.sum(val.reshape(tr // acc_rows, acc_rows, w), axis=0)
    else:
        part = val
    acc_ref[...] = acc_ref[...] + part

    @pl.when(pl.program_id(0) == pl.num_programs(0) - 1)
    def _():
        out_ref[...] = jnp.sum(acc_ref[...], keepdims=True) * inv_n


# ---------------------------------------------------------------------------
# Wrappers (pallas_call glue)
# ---------------------------------------------------------------------------

def kl_normal(mean, log_var, *, max_rows_per_tile=None):
    assert mean.ndim == 2 and mean.shape == log_var.shape
    B, D = mean.shape
    N = B * D

    # Lane-dense flatten whenever possible: contiguous reshape, no HBM copy, exact
    # because the global sum is order-invariant.  Otherwise keep [B, D] (last block
    # dim equals the full D, which satisfies the (8, 128) rule for any D).
    if N % _LANE == 0:
        rows, w = N // _LANE, _LANE
        m2d = mean.reshape(rows, _LANE)
        lv2d = log_var.reshape(rows, _LANE)
    else:
        rows, w = B, D
        m2d, lv2d = mean, log_var

    itemsize = jnp.dtype(mean.dtype).itemsize
    bytes_per_row = max(w * itemsize, 1)

    if rows < _SUBLANE:
        # Single exact tile covering the whole (tiny) array.
        tb = rows
    else:
        # 2 inputs x 2 pipeline buffers each must fit the budget.
        tb = _INPUT_VMEM_BUDGET // (4 * bytes_per_row)
        tb = max(_SUBLANE, (tb // _SUBLANE) * _SUBLANE)
        if max_rows_per_tile is not None:
            tb = min(tb, max(_SUBLANE, (max_rows_per_tile // _SUBLANE) * _SUBLANE))
        # Never let the block exceed the array; ragged last block is masked in-kernel.
        tb = min(tb, (rows // _SUBLANE) * _SUBLANE)

    grid = -(-rows // tb)
    acc_rows = _SUBLANE if tb >= _SUBLANE else tb

    kernel = functools.partial(_kl_normal_kernel, n_valid_rows=rows, scale=0.5 / B)
    out = pl.pallas_call(
        kernel,
        out_shape=jax.ShapeDtypeStruct((1, 1), jnp.float32),
        grid_spec=pltpu.PrefetchScalarGridSpec(
            num_scalar_prefetch=0,
            grid=(grid,),
            in_specs=[
                pl.BlockSpec((tb, w), lambda i: (i, 0)),
                pl.BlockSpec((tb, w), lambda i: (i, 0)),
            ],
            out_specs=pl.BlockSpec((1, 1), lambda i: (0, 0)),
            scratch_shapes=[pltpu.VMEM((acc_rows, w), jnp.float32)],
        ),
        compiler_params=pltpu.CompilerParams(
            dimension_semantics=("arbitrary",),
            vmem_limit_bytes=_VMEM_LIMIT_BYTES,
        ),
    )(m2d, lv2d)
    return out[0, 0]


def kl_cayley(param2, dim, *, max_rows_per_tile=None):
    if dim not in (2, 3):
        # TODO(synk): general cayley branch needs SO(n) sampling (scipy), a linear
        # solve and a determinant per sample; no clean Pallas equivalent implemented.
        raise NotImplementedError("cayley KL for dim > 3 not implemented in Pallas")

    p = jnp.asarray(param2, jnp.float32).reshape(-1)
    B = p.shape[0]

    # Lane+sublane-dense layout: (rows, 128), rows a multiple of 8 and of the tile.
    rows = _round_up(max(-(-B // _LANE), _SUBLANE), _SUBLANE)
    tr = _INPUT_VMEM_BUDGET // (2 * _LANE * 4)        # 1 input x 2 buffers
    tr = max(_SUBLANE, (tr // _SUBLANE) * _SUBLANE)
    if max_rows_per_tile is not None:
        tr = max(_SUBLANE, min(tr, _round_up(max_rows_per_tile, _SUBLANE)))
    tr = min(tr, rows)
    rows = _round_up(rows, tr)

    total = rows * _LANE
    if total != B:
        # gamma == 1 contributes exactly 0 in the gamma-rewritten form (dim 2 and 3).
        # Batch of gammas is tiny, so this pad copy is negligible.
        p = jnp.concatenate([p, jnp.ones((total - B,), jnp.float32)])
    p2d = p.reshape(rows, _LANE)

    kernel = functools.partial(_kl_cayley_kernel, dim=dim, inv_n=1.0 / B)
    out = pl.pallas_call(
        kernel,
        out_shape=jax.ShapeDtypeStruct((1, 1), jnp.float32),
        grid_spec=pltpu.PrefetchScalarGridSpec(
            num_scalar_prefetch=0,
            grid=(rows // tr,),
            in_specs=[pl.BlockSpec((tr, _LANE), lambda i: (i, 0))],
            out_specs=pl.BlockSpec((1, 1), lambda i: (0, 0)),
            scratch_shapes=[pltpu.VMEM((_SUBLANE, _LANE), jnp.float32)],
        ),
        compiler_params=pltpu.CompilerParams(
            dimension_semantics=("arbitrary",),
            vmem_limit_bytes=_VMEM_LIMIT_BYTES,
        ),
    )(p2d)
    return out[0, 0]


class KLDivergence:
    """Pallas-backed equivalent of the PyTorch KLDivergence module (forward)."""

    def __init__(self, distribution, dim=None):
        self.dist = distribution
        self.dim = dim

    def __call__(self, param1, param2):
        if self.dist == "normal":
            return kl_normal(param1, param2)
        elif self.dist == "cayley":
            return kl_cayley(param2, self.dim)
        else:
            raise ValueError(f"Unsupported distribution {self.dist}")


# ---------------------------------------------------------------------------
# Pure-JAX references (for correctness checks)
# ---------------------------------------------------------------------------

def _ref_normal(mean, log_var):
    inner = -(log_var - mean ** 2 - jnp.exp(log_var) + 1.0) / 2.0
    return jnp.mean(jnp.sum(inner, axis=1), axis=0)


def _ref_cayley(param2, dim):
    k = (1.0 - param2) / (param2 + 1.0)
    if dim == 2:
        return jnp.mean(-jnp.log(1.0 - k ** 2))
    else:
        return jnp.mean(-jnp.log(1.0 - k ** 2) - 2.0 * jnp.log(1.0 - k) - 2.0 * k)


if __name__ == "__main__":
    key = jax.random.PRNGKey(0)
    keys = jax.random.split(key, 8)

    # --- normal branch, [B, D] fallback layout, single exact tile: [2, 32] ---
    B, D = 2, 32
    mean = jax.random.normal(keys[0], (B, D), dtype=jnp.float32)
    log_var = 0.5 * jax.random.normal(keys[1], (B, D), dtype=jnp.float32)
    kl_n = jax.block_until_ready(KLDivergence("normal")(mean, log_var))
    ref_n = _ref_normal(mean, log_var)
    assert jnp.allclose(kl_n, ref_n, rtol=1e-5, atol=1e-5), (kl_n, ref_n)

    # --- normal branch, lane-dense flatten, multi-step grid + ragged masked
    #     last tile: [40, 32] -> 10 rows of 128, 8-row tiles ---
    mean2 = jax.random.normal(keys[2], (40, 32), dtype=jnp.float32)
    log_var2 = 0.5 * jax.random.normal(keys[3], (40, 32), dtype=jnp.float32)
    kl_n2 = jax.block_until_ready(kl_normal(mean2, log_var2, max_rows_per_tile=8))
    ref_n2 = _ref_normal(mean2, log_var2)
    assert jnp.allclose(kl_n2, ref_n2, rtol=1e-5, atol=1e-5), (kl_n2, ref_n2)

    # --- normal branch, [B, D] fallback layout (B*D % 128 != 0), multi-step grid
    #     + ragged masked last tile: [20, 24], 8-row tiles ---
    mean3 = jax.random.normal(keys[4], (20, 24), dtype=jnp.float32)
    log_var3 = 0.5 * jax.random.normal(keys[5], (20, 24), dtype=jnp.float32)
    kl_n3 = jax.block_until_ready(kl_normal(mean3, log_var3, max_rows_per_tile=8))
    ref_n3 = _ref_normal(mean3, log_var3)
    assert jnp.allclose(kl_n3, ref_n3, rtol=1e-5, atol=1e-5), (kl_n3, ref_n3)

    # --- cayley branch, dim=2 and dim=3: gammas of shape [8] in (0, 1) ---
    g2 = jax.random.uniform(keys[6], (8,), minval=0.1, maxval=0.9, dtype=jnp.float32)
    g3 = jax.random.uniform(keys[7], (8,), minval=0.1, maxval=0.9, dtype=jnp.float32)
    kl_c2 = jax.block_until_ready(KLDivergence("cayley", dim=2)(None, g2))
    kl_c3 = jax.block_until_ready(KLDivergence("cayley", dim=3)(None, g3))
    assert jnp.allclose(kl_c2, _ref_cayley(g2, 2), rtol=1e-5, atol=1e-5)
    assert jnp.allclose(kl_c3, _ref_cayley(g3, 3), rtol=1e-5, atol=1e-5)

    print("KERNEL_OK")
</pallas_src>

<mosaic_0001>
module attributes {stable_mosaic.version = 11 : i64} {
  func.func @_kl_normal_kernel(%arg0: i32, %arg1: memref<2x32xf32, #tpu.memory_space<vmem>>, %arg2: memref<2x32xf32, #tpu.memory_space<vmem>>, %arg3: memref<1x1xf32, #tpu.memory_space<vmem>>, %arg4: memref<2x32xf32, #tpu.memory_space<vmem>>) attributes {dimension_semantics = [#tpu.dimension_semantics<arbitrary>], iteration_bounds = array<i64: 1>, scalar_prefetch = 0 : i64, scratch_operands = 1 : i64, tpu.core_type = #tpu.core_type<tc>, window_params = [{transform_indices = @transform_0, window_bounds = array<i64: 2, 32>}, {transform_indices = @transform_1, window_bounds = array<i64: 2, 32>}, {pipeline_mode = #tpu.pipeline_mode<synchronous>, transform_indices = @transform_2, window_bounds = array<i64: 1, 1>}]} {
    %c0_i32 = arith.constant 0 : i32
    %0 = arith.cmpi eq, %arg0, %c0_i32 : i32
    %1 = arith.extui %0 : i1 to i32
    %c0_i32_0 = arith.constant 0 : i32
    %2 = arith.cmpi ne, %1, %c0_i32_0 : i32
    scf.if %2 {
      %cst_13 = arith.constant 0.000000e+00 : f32
      %27 = vector.broadcast %cst_13 : f32 to vector<2x32xf32>
      %c0_14 = arith.constant 0 : index
      %c0_15 = arith.constant 0 : index
      %28 = vector.load %arg4[%c0_14, %c0_15] : memref<2x32xf32, #tpu.memory_space<vmem>>, vector<2x32xf32>
      tpu.vector_store %arg4[%c0_14, %c0_15], %27 {strides = array<i32>} : memref<2x32xf32, #tpu.memory_space<vmem>>, vector<2x32xf32>,
    } else {
    }
    %c2_i32 = arith.constant 2 : i32
    %3 = arith.muli %arg0, %c2_i32 : i32
    %4 = tpu.iota {dimensions = array<i32: 0>} : vector<2x32xi32>
    %5 = vector.broadcast %3 : i32 to vector<2x32xi32>
    %6 = arith.addi %5, %4 : vector<2x32xi32>
    %c2_i32_1 = arith.constant 2 : i32
    %7 = vector.broadcast %c2_i32_1 : i32 to vector<2x32xi32>
    %8 = arith.cmpi slt, %6, %7 : vector<2x32xi32>
    %c0 = arith.constant 0 : index
    %c0_2 = arith.constant 0 : index
    %9 = vector.load %arg1[%c0, %c0_2] : memref<2x32xf32, #tpu.memory_space<vmem>>, vector<2x32xf32>
    %cst = arith.constant 0.000000e+00 : f32
    %10 = vector.broadcast %cst : f32 to vector<2x32xf32>
    %11 = arith.select %8, %9, %10 : vector<2x32xi1>, vector<2x32xf32>
    %c0_3 = arith.constant 0 : index
    %c0_4 = arith.constant 0 : index
    %12 = vector.load %arg2[%c0_3, %c0_4] : memref<2x32xf32, #tpu.memory_space<vmem>>, vector<2x32xf32>
    %cst_5 = arith.constant 0.000000e+00 : f32
    %13 = vector.broadcast %cst_5 : f32 to vector<2x32xf32>
    %14 = arith.select %8, %12, %13 : vector<2x32xi1>, vector<2x32xf32>
    %15 = arith.mulf %11, %11 : vector<2x32xf32>
    %16 = math.exp %14 : vector<2x32xf32>
    %17 = arith.addf %15, %16 : vector<2x32xf32>
    %18 = arith.subf %17, %14 : vector<2x32xf32>
    %cst_6 = arith.constant 1.000000e+00 : f32
    %19 = vector.broadcast %cst_6 : f32 to vector<2x32xf32>
    %20 = arith.subf %18, %19 : vector<2x32xf32>
    %c0_7 = arith.constant 0 : index
    %c0_8 = arith.constant 0 : index
    %21 = vector.load %arg4[%c0_7, %c0_8] : memref<2x32xf32, #tpu.memory_space<vmem>>, vector<2x32xf32>
    %22 = arith.addf %21, %20 : vector<2x32xf32>
    %c0_9 = arith.constant 0 : index
    %c0_10 = arith.constant 0 : index
    %23 = vector.load %arg4[%c0_9, %c0_10] : memref<2x32xf32, #tpu.memory_space<vmem>>, vector<2x32xf32>
    tpu.vector_store %arg4[%c0_9, %c0_10], %22 {strides = array<i32>} : memref<2x32xf32, #tpu.memory_space<vmem>>, vector<2x32xf32>,
    %c0_i32_11 = arith.constant 0 : i32
    %24 = arith.cmpi eq, %arg0, %c0_i32_11 : i32
    %25 = arith.extui %24 : i1 to i32
    %c0_i32_12 = arith.constant 0 : i32
    %26 = arith.cmpi ne, %25, %c0_i32_12 : i32
    scf.if %26 {
      %c0_13 = arith.constant 0 : index
      %c0_14 = arith.constant 0 : index
      %27 = vector.load %arg4[%c0_13, %c0_14] : memref<2x32xf32, #tpu.memory_space<vmem>>, vector<2x32xf32>
      %28 = vector.shape_cast %27 : vector<2x32xf32> to vector<1x2x32xf32>
      %cst_15 = arith.constant dense<0.000000e+00> : vector<1xf32>
      %29 = vector.multi_reduction <add>, %28, %cst_15 [1, 2] : vector<1x2x32xf32> to vector<1xf32>
      %30 = vector.shape_cast %29 : vector<1xf32> to vector<1x1x1xf32>
      %31 = vector.extract %30[0, 0, 0] : f32 from vector<1x1x1xf32>
      %32 = vector.broadcast %31 : f32 to vector<1x1xf32>
      %cst_16 = arith.constant 2.500000e-01 : f32
      %33 = vector.broadcast %cst_16 : f32 to vector<1x1xf32>
      %34 = arith.mulf %32, %33 : vector<1x1xf32>
      %c0_17 = arith.constant 0 : index
      %c0_18 = arith.constant 0 : index
      %35 = vector.load %arg3[%c0_17, %c0_18] : memref<1x1xf32, #tpu.memory_space<vmem>>, vector<1x1xf32>
      tpu.vector_store %arg3[%c0_17, %c0_18], %34 {strides = array<i32>} : memref<1x1xf32, #tpu.memory_space<vmem>>, vector<1x1xf32>,
    } else {
    }
    return
  }
  func.func @transform_0(%arg0: i32) -> (i32, i32) {
    %c0_i32 = arith.constant 0 : i32
    %c0_i32_0 = arith.constant 0 : i32
    return %arg0, %c0_i32 : i32, i32
  }
  func.func @transform_1(%arg0: i32) -> (i32, i32) {
    %c0_i32 = arith.constant 0 : i32
    %c0_i32_0 = arith.constant 0 : i32
    return %arg0, %c0_i32 : i32, i32
  }
  func.func @transform_2(%arg0: i32) -> (i32, i32) {
    %c0_i32 = arith.constant 0 : i32
    %c0_i32_0 = arith.constant 0 : i32
    %c0_i32_1 = arith.constant 0 : i32
    return %c0_i32, %c0_i32_0 : i32, i32
  }
}

</mosaic_0001>

<llo_original>
// kernel: tpu_custom_call.1
$region0: #{tpu_custom_call.1}
  #allocation0 [shape = 'u32[]', space=smem, size = 0x4, offset = 0x4, fixed_abs, tag = 'smem constant byte address 0x4 - core index']
  #allocation1 [shape = 'u32[144,128]{1,0:T(1,128)}', space=vmem, size = 0x12000, scoped, tag = 'internal scratch']
  #allocation2 [shape = 'f32[2,32]{1,0:T(2,128)}', space=vmem, size = 0x400, scoped, tag = 'scratch operand']
  %s0 = inlined_call_operand.hbm [shape: f32[2,32], index: 0, kind: input, shape index: {}]
  %s1 = inlined_call_operand.hbm [shape: f32[2,32], index: 1, kind: input, shape index: {}]
  %s2 = inlined_call_operand.hbm [shape: f32[1,1], index: 2, kind: output, shape index: {}]
  %s3 = sld [smem:[#allocation0]]
  $region34: #{tpu_custom_call.1} parent=0
    _
  %s5 = ssub.s32 1, %s3
  %s6 = scalar_select 0, %s5, %s3
  $region1: #{tpu_custom_call.1} parent=0
    #allocation3 [shape = 'u8[1024]{0}', space=vmem, size = 0x400, scoped, tag = 'input window, operand 0, single buffered']
    #allocation4 [shape = 's32[1]{0}', space=sflag, size = 0x4, scoped, tag = 'scoped memory for tpu_custom_call.1']
    #allocation5 [shape = 's32[1]{0}', space=sflag, size = 0x4, scoped, tag = 'scoped memory for tpu_custom_call.1']
    #allocation6 [shape = 'u8[1024]{0}', space=vmem, size = 0x400, scoped, tag = 'input window, operand 1, single buffered']
    #allocation7 [shape = 's32[1]{0}', space=sflag, size = 0x4, scoped, tag = 'scoped memory for tpu_custom_call.1']
    #allocation8 [shape = 'u8[512]{0}', space=vmem, size = 0x400, scoped, tag = 'output window, operand 0, single buffered']
    %7 = vsyncpa [#allocation4], 0
    %8 = vsyncpa [#allocation7], 0
    %9 = vsyncpa [#allocation5], 0
    // Predicated region
    $region2: #{tpu_custom_call.1} parent=1 // pred_check
      _
    $region3: #{tpu_custom_call.1} parent=1 // pred_check_branch
      %11 = sbr.rel (0) target = $region5
    $region4: #{tpu_custom_call.1} parent=1 // pred_region
      %s13 = ssub.s32 32, 32
      %14 = vsyncadd [#allocation4], %s13
      %s16 = sshll.u32 [#allocation3], 4
      %s17 = int_to_ptr.vmem [resolvable:$true] %s16
      %19 = dma.hbm_to_vmem [thread:$0]  %s0, 32, %s17, [#allocation4]
    $region5: #{tpu_custom_call.1} parent=1 // pred_fallthru
      _
    // Predicated region
    $region6: #{tpu_custom_call.1} parent=1 // pred_check
      _
    $region7: #{tpu_custom_call.1} parent=1 // pred_check_branch
      %21 = sbr.rel (0) target = $region9
    $region8: #{tpu_custom_call.1} parent=1 // pred_region
      %s23 = ssub.s32 32, 32
      %24 = vsyncadd [#allocation7], %s23
      %s26 = sshll.u32 [#allocation6], 4
      %s27 = int_to_ptr.vmem [resolvable:$true] %s26
      %29 = dma.hbm_to_vmem [thread:$0]  %s1, 32, %s27, [#allocation7]
    $region9: #{tpu_custom_call.1} parent=1 // pred_fallthru
      _
    // Predicated region
    $region10: #{tpu_custom_call.1} parent=1 // pred_check
      _
    $region11: #{tpu_custom_call.1} parent=1 // pred_check_branch
      %31 = sbr.rel (0) target = $region13
    $region12: #{tpu_custom_call.1} parent=1 // pred_region
      %32 = dma.done [#allocation4], 32
    $region13: #{tpu_custom_call.1} parent=1 // pred_fallthru
      _
    // Predicated region
    $region14: #{tpu_custom_call.1} parent=1 // pred_check
      _
    $region15: #{tpu_custom_call.1} parent=1 // pred_check_branch
      %34 = sbr.rel (0) target = $region17
    $region16: #{tpu_custom_call.1} parent=1 // pred_region
      %35 = dma.done [#allocation7], 32
    $region17: #{tpu_custom_call.1} parent=1 // pred_fallthru
      _
    %p36 = scmp.eq.s32.totalorder 0, 0
    // Predicated region
    $region18: #{tpu_custom_call.1} parent=1 // pred_check
      %p37 = pneg %p36
    $region19: #{tpu_custom_call.1} parent=1 // pred_check_branch
      %39 = sbr.rel (%p37) target = $region21
    $region20: #{tpu_custom_call.1} parent=1 // pred_region
      %vm40 = vcmask 254976
      %41 = vst.msk [vmem:[#allocation2] sm:$0x3] %vm40, 0.0
    $region21: #{tpu_custom_call.1} parent=1 // pred_fallthru
      _
    %s42 = smul.u32 0, 2
    %v43 = vlaneseq
    %v44 = vshrl.u32 %v43, 7
    %v45 = vstv %s42
    %v46 = vadd.s32 %v45, %v44
    %vm47 = vcmp.lt.s32.totalorder %v46, 2
    %v48 = vld [vmem:[#allocation3] sm:$0x3]
    %v49 = vsel %vm47, %v48, 0.0
    %v50 = vld [vmem:[#allocation6] sm:$0x3]
    %v51 = vsel %vm47, %v50, 0.0
    %v52 = vmul.f32 %v49, %v49
    %v53 = vmul.f32 %v51, 1.442695
    %v54 = vpow.pop %v53
    %v55 = vadd.f32 %v52, %v54
    %v56 = vsub.f32 %v55, %v51
    %v57 = vsub.f32 %v56, 1.0
    %v58 = vld [vmem:[#allocation2] sm:$0x3]
    %v59 = vadd.f32 %v58, %v57
    %vm60 = vcmask 254976
    %61 = vst.msk [vmem:[#allocation2] sm:$0x3] %vm60, %v59
    // Predicated region
    $region22: #{tpu_custom_call.1} parent=1 // pred_check
      %p62 = pneg %p36
    $region23: #{tpu_custom_call.1} parent=1 // pred_check_branch
      %64 = sbr.rel (%p62) target = $region25
    $region24: #{tpu_custom_call.1} parent=1 // pred_region
      %v65 = vld [vmem:[#allocation2] sm:$0x3]
      %v66 = vsel %vm60, %v65, 0.0
      %67 = vadd.xlane.f32.xlu0 %v66
      %v68 = vpop.xlane.xlu0 %67
      %v69 = vrot.slane %v68, 4
      %v70 = vadd.f32 %v68, %v69
      %v71 = vrot.slane %v70, 2
      %v72 = vadd.f32 %v70, %v71
      %v73 = vrot.slane %v72, 1
      %v74 = vadd.f32 %v72, %v73
      %s75 = vtos %v74
      %v76 = vstv %s75
      %v77 = vmul.f32 %v76, 0.25
      %vm78 = vcmask 0
      %79 = vst.msk [vmem:[#allocation8] sm:$0x1] %vm78, %v77
    $region25: #{tpu_custom_call.1} parent=1 // pred_fallthru
      _
    // Predicated region
    $region26: #{tpu_custom_call.1} parent=1 // pred_check
      _
    $region27: #{tpu_custom_call.1} parent=1 // pred_check_branch
      %81 = sbr.rel (0) target = $region29
    $region28: #{tpu_custom_call.1} parent=1 // pred_region
      %s83 = ssub.s32 16, 16
      %84 = vsyncadd [#allocation5], %s83
      %s86 = sshll.u32 [#allocation8], 4
      %s87 = int_to_ptr.vmem [resolvable:$true] %s86
      %89 = dma.vmem_to_hbm [thread:$0]  %s87, 16, %s2, [#allocation5]
    $region29: #{tpu_custom_call.1} parent=1 // pred_fallthru
      _
    // Predicated region
    $region30: #{tpu_custom_call.1} parent=1 // pred_check
      _
    $region31: #{tpu_custom_call.1} parent=1 // pred_check_branch
      %91 = sbr.rel (0) target = $region33
    $region32: #{tpu_custom_call.1} parent=1 // pred_region
      %92 = dma.done [#allocation5], 16
    $region33: #{tpu_custom_call.1} parent=1 // pred_fallthru
      _
    %93 = vsyncpa [#allocation4], 1
    %94 = vsyncpa [#allocation7], 1
    %95 = vsyncpa [#allocation5], 1

</llo_original>
